<compile_context>
chip_gen: v6e
topology: v6e:2x2x1
jax: 0.10.0
libtpu: 0.0.40
codegen_flags: <defaults>
</compile_context>

<pallas_src>
import math

import jax
import jax.numpy as jnp
from jax.experimental import pallas as pl
from jax.experimental.pallas import tpu as pltpu


def _pick_tile(dim, candidates):
    """Largest candidate tile that evenly divides `dim`, else the full dim."""
    for t in candidates:
        if t <= dim and dim % t == 0:
            return t
    return dim


def _make_equal_linear_kernel(scale, lr_mul, activation, has_bias):
    negative_slope = 0.2
    act_gain = math.sqrt(2.0)  # fused_leaky_relu gain (StyleGAN2 definition)

    def kernel(x_ref, w_ref, b_ref, o_ref, acc_ref):
        # x_ref: (tm, tk)   w_ref: (tn, tk)   b_ref: (1, tn)   o_ref: (tm, tn)
        @pl.when(pl.program_id(2) == 0)
        def _():
            acc_ref[...] = jnp.zeros_like(acc_ref)

        # Contract the in_dim axis of x (dim 1) with in_dim axis of W (dim 1):
        # this is x @ W.T without ever materializing a transpose.
        acc_ref[...] += jax.lax.dot_general(
            x_ref[...],
            w_ref[...],
            dimension_numbers=(((1,), (1,)), ((), ())),
            preferred_element_type=jnp.float32,
        )

        @pl.when(pl.program_id(2) == pl.num_programs(2) - 1)
        def _():
            y = acc_ref[...] * jnp.float32(scale)
            if has_bias:
                y = y + b_ref[...].astype(jnp.float32) * jnp.float32(lr_mul)
            if activation:
                # fused_leaky_relu: leaky_relu(y + b, 0.2) * sqrt(2)
                y = jnp.where(y >= 0, y, negative_slope * y) * jnp.float32(act_gain)
            o_ref[...] = y.astype(o_ref.dtype)

    return kernel


def equal_linear(x, weight, bias=None, lr_mul=1.0, activation=False):
    """Forward pass of EqualLinear via a Pallas TPU matmul kernel.

    x:      (..., in_dim)
    weight: (out_dim, in_dim)   (PyTorch nn.Linear layout)
    bias:   (out_dim,) or None
    """
    out_dim, in_dim = weight.shape
    scale = 1.0 / math.sqrt(in_dim) * lr_mul

    orig_shape = x.shape
    x2 = x.reshape(-1, in_dim)
    M, K = x2.shape
    N = out_dim

    # MXU-friendly tiles when divisible, full-dim blocks for small shapes.
    tm = _pick_tile(M, (1024, 512, 256, 128, 64, 32, 16, 8))   # sublane axis
    tn = _pick_tile(N, (512, 256, 128))                        # lane axis of out
    tk = _pick_tile(K, (512, 256, 128))                        # lane axis of in

    has_bias = bias is not None
    b2 = (bias if has_bias else jnp.zeros((out_dim,), dtype=x.dtype)).reshape(1, out_dim)

    kernel = _make_equal_linear_kernel(scale, lr_mul, activation, has_bias)

    grid = (M // tm, N // tn, K // tk)

    out = pl.pallas_call(
        kernel,
        out_shape=jax.ShapeDtypeStruct((M, N), x.dtype),
        grid_spec=pltpu.PrefetchScalarGridSpec(
            num_scalar_prefetch=0,
            grid=grid,
            in_specs=[
                pl.BlockSpec((tm, tk), lambda i, j, k: (i, k)),   # x tile
                pl.BlockSpec((tn, tk), lambda i, j, k: (j, k)),   # weight tile
                pl.BlockSpec((1, tn), lambda i, j, k: (0, j)),    # bias tile
            ],
            out_specs=pl.BlockSpec((tm, tn), lambda i, j, k: (i, j)),
            scratch_shapes=[pltpu.VMEM((tm, tn), jnp.float32)],
        ),
        compiler_params=pltpu.CompilerParams(
            dimension_semantics=("parallel", "parallel", "arbitrary"),
            vmem_limit_bytes=32 * 1024 * 1024,  # explicit; safe on v5e/v6e/v7x
        ),
    )(x2, weight, b2)

    return out.reshape(orig_shape[:-1] + (out_dim,))


def _reference(x, weight, bias, lr_mul, activation):
    in_dim = weight.shape[1]
    scale = 1.0 / math.sqrt(in_dim) * lr_mul
    y = jnp.einsum("...k,nk->...n", x, weight * scale)
    b = None if bias is None else bias * lr_mul
    if activation:
        if b is not None:
            y = y + b
        y = jnp.where(y >= 0, y, 0.2 * y) * math.sqrt(2.0)
    else:
        if b is not None:
            y = y + b
    return y


if __name__ == "__main__":
    key = jax.random.PRNGKey(0)
    k_x, k_w, k_b = jax.random.split(key, 3)

    batch, seq, in_dim, out_dim = 2, 8, 32, 32
    lr_mul = 1.0

    x = jax.random.normal(k_x, (batch, seq, in_dim), dtype=jnp.float32)
    # weight init mirrors torch.randn(out_dim, in_dim) / lr_mul
    weight = jax.random.normal(k_w, (out_dim, in_dim), dtype=jnp.float32) / lr_mul
    # use a non-zero bias so the bias path is actually exercised
    bias = jax.random.normal(k_b, (out_dim,), dtype=jnp.float32)

    # activation=False (module default) and activation=True (fused leaky relu)
    ok = True
    for activation in (False, True):
        y = equal_linear(x, weight, bias, lr_mul=lr_mul, activation=activation)
        y = jax.block_until_ready(y)
        ref = _reference(x, weight, bias, lr_mul, activation)
        ok &= y.shape == ref.shape and y.dtype == x.dtype
        ok &= bool(jnp.allclose(y, ref, atol=1e-4, rtol=1e-4))

    assert ok
    print("KERNEL_OK")
</pallas_src>

<mosaic_0001>
module attributes {stable_mosaic.version = 11 : i64} {
  func.func @kernel(%arg0: i32, %arg1: i32, %arg2: i32, %arg3: memref<16x32xf32, #tpu.memory_space<vmem>>, %arg4: memref<32x32xf32, #tpu.memory_space<vmem>>, %arg5: memref<1x32xf32, #tpu.memory_space<vmem>>, %arg6: memref<16x32xf32, #tpu.memory_space<vmem>>, %arg7: memref<16x32xf32, #tpu.memory_space<vmem>>) attributes {dimension_semantics = [#tpu.dimension_semantics<parallel>, #tpu.dimension_semantics<parallel>, #tpu.dimension_semantics<arbitrary>], iteration_bounds = array<i64: 1, 1, 1>, scalar_prefetch = 0 : i64, scratch_operands = 1 : i64, tpu.core_type = #tpu.core_type<tc>, window_params = [{transform_indices = @transform_0, window_bounds = array<i64: 16, 32>}, {transform_indices = @transform_1, window_bounds = array<i64: 32, 32>}, {transform_indices = @transform_2, window_bounds = array<i64: 1, 32>}, {transform_indices = @transform_3, window_bounds = array<i64: 16, 32>}]} {
    %c0_i32 = arith.constant 0 : i32
    %0 = arith.cmpi eq, %arg2, %c0_i32 : i32
    %1 = arith.extui %0 : i1 to i32
    %c0_i32_0 = arith.constant 0 : i32
    %2 = arith.cmpi ne, %1, %c0_i32_0 : i32
    scf.if %2 {
      %cst_10 = arith.constant 0.000000e+00 : f32
      %12 = vector.broadcast %cst_10 : f32 to vector<16x32xf32>
      %c0_11 = arith.constant 0 : index
      %c0_12 = arith.constant 0 : index
      %13 = vector.load %arg7[%c0_11, %c0_12] : memref<16x32xf32, #tpu.memory_space<vmem>>, vector<16x32xf32>
      tpu.vector_store %arg7[%c0_11, %c0_12], %12 {strides = array<i32>} : memref<16x32xf32, #tpu.memory_space<vmem>>, vector<16x32xf32>,
    } else {
    }
    %c0 = arith.constant 0 : index
    %c0_1 = arith.constant 0 : index
    %3 = vector.load %arg7[%c0, %c0_1] : memref<16x32xf32, #tpu.memory_space<vmem>>, vector<16x32xf32>
    %c0_2 = arith.constant 0 : index
    %c0_3 = arith.constant 0 : index
    %4 = vector.load %arg3[%c0_2, %c0_3] : memref<16x32xf32, #tpu.memory_space<vmem>>, vector<16x32xf32>
    %c0_4 = arith.constant 0 : index
    %c0_5 = arith.constant 0 : index
    %5 = vector.load %arg4[%c0_4, %c0_5] : memref<32x32xf32, #tpu.memory_space<vmem>>, vector<32x32xf32>
    %cst = arith.constant dense<0.000000e+00> : vector<16x32xf32>
    %6 = tpu.matmul %4, %5, %cst {dimension_numbers = #tpu.dot_dimension_numbers<[1], [1], [0], [0], [0, 0, 1, 0], [], []>} : vector<16x32xf32>, vector<32x32xf32>, vector<16x32xf32> -> vector<16x32xf32>
    %7 = arith.addf %3, %6 : vector<16x32xf32>
    %c0_6 = arith.constant 0 : index
    %c0_7 = arith.constant 0 : index
    %8 = vector.load %arg7[%c0_6, %c0_7] : memref<16x32xf32, #tpu.memory_space<vmem>>, vector<16x32xf32>
    tpu.vector_store %arg7[%c0_6, %c0_7], %7 {strides = array<i32>} : memref<16x32xf32, #tpu.memory_space<vmem>>, vector<16x32xf32>,
    %c0_i32_8 = arith.constant 0 : i32
    %9 = arith.cmpi eq, %arg2, %c0_i32_8 : i32
    %10 = arith.extui %9 : i1 to i32
    %c0_i32_9 = arith.constant 0 : i32
    %11 = arith.cmpi ne, %10, %c0_i32_9 : i32
    scf.if %11 {
      %c0_10 = arith.constant 0 : index
      %c0_11 = arith.constant 0 : index
      %12 = vector.load %arg7[%c0_10, %c0_11] : memref<16x32xf32, #tpu.memory_space<vmem>>, vector<16x32xf32>
      %cst_12 = arith.constant 0.176776692 : f32
      %13 = vector.broadcast %cst_12 : f32 to vector<16x32xf32>
      %14 = arith.mulf %12, %13 : vector<16x32xf32>
      %c0_13 = arith.constant 0 : index
      %c0_14 = arith.constant 0 : index
      %15 = vector.load %arg5[%c0_13, %c0_14] : memref<1x32xf32, #tpu.memory_space<vmem>>, vector<1x32xf32>
      %cst_15 = arith.constant 1.000000e+00 : f32
      %16 = vector.broadcast %cst_15 : f32 to vector<1x32xf32>
      %17 = arith.mulf %15, %16 : vector<1x32xf32>
      %18 = vector.broadcast %17 : vector<1x32xf32> to vector<16x32xf32>
      %19 = arith.addf %14, %18 : vector<16x32xf32>
      %c0_16 = arith.constant 0 : index
      %c0_17 = arith.constant 0 : index
      %20 = vector.load %arg6[%c0_16, %c0_17] : memref<16x32xf32, #tpu.memory_space<vmem>>, vector<16x32xf32>
      tpu.vector_store %arg6[%c0_16, %c0_17], %19 {strides = array<i32>} : memref<16x32xf32, #tpu.memory_space<vmem>>, vector<16x32xf32>,
    } else {
    }
    return
  }
  func.func @transform_0(%arg0: i32, %arg1: i32, %arg2: i32) -> (i32, i32) {
    %c0_i32 = arith.constant 0 : i32
    return %arg0, %arg2 : i32, i32
  }
  func.func @transform_1(%arg0: i32, %arg1: i32, %arg2: i32) -> (i32, i32) {
    %c0_i32 = arith.constant 0 : i32
    return %arg1, %arg2 : i32, i32
  }
  func.func @transform_2(%arg0: i32, %arg1: i32, %arg2: i32) -> (i32, i32) {
    %c0_i32 = arith.constant 0 : i32
    %c0_i32_0 = arith.constant 0 : i32
    return %c0_i32, %arg1 : i32, i32
  }
  func.func @transform_3(%arg0: i32, %arg1: i32, %arg2: i32) -> (i32, i32) {
    %c0_i32 = arith.constant 0 : i32
    return %arg0, %arg1 : i32, i32
  }
}

</mosaic_0001>

<llo_original>
// kernel: tpu_custom_call.1
$region0: #{tpu_custom_call.1}
  #allocation0 [shape = 'u32[]', space=smem, size = 0x4, offset = 0x4, fixed_abs, tag = 'smem constant byte address 0x4 - core index']
  #allocation1 [shape = 'u32[144,128]{1,0:T(1,128)}', space=vmem, size = 0x12000, scoped, tag = 'internal scratch']
  #allocation2 [shape = 'f32[16,32]{1,0:T(8,128)}', space=vmem, size = 0x2000, scoped, tag = 'scratch operand']
  %s0 = inlined_call_operand.hbm [shape: f32[16,32], index: 0, kind: input, shape index: {}]
  %s1 = inlined_call_operand.hbm [shape: f32[32,32], index: 1, kind: input, shape index: {}]
  %s2 = inlined_call_operand.vmem [shape: f32[1,32], index: 2, kind: input, shape index: {}]
  %s3 = inlined_call_operand.hbm [shape: f32[16,32], index: 3, kind: output, shape index: {}]
  %s4 = sld [smem:[#allocation0]]
  $region38: #{tpu_custom_call.1} parent=0
    _
  %s6 = ssub.s32 1, %s4
  %s7 = scalar_select 0, %s6, %s4
  $region1: #{tpu_custom_call.1} parent=0
    #allocation3 [shape = 'u8[8192]{0}', space=vmem, size = 0x2000, scoped, tag = 'input window, operand 0, single buffered']
    #allocation4 [shape = 's32[1]{0}', space=sflag, size = 0x4, scoped, tag = 'scoped memory for tpu_custom_call.1']
    #allocation5 [shape = 's32[1]{0}', space=sflag, size = 0x4, scoped, tag = 'scoped memory for tpu_custom_call.1']
    #allocation6 [shape = 'u8[16384]{0}', space=vmem, size = 0x4000, scoped, tag = 'input window, operand 1, single buffered']
    #allocation7 [shape = 's32[1]{0}', space=sflag, size = 0x4, scoped, tag = 'scoped memory for tpu_custom_call.1']
    #allocation8 [shape = 'u8[8192]{0}', space=vmem, size = 0x2000, scoped, tag = 'output window, operand 0, single buffered']
    %8 = vsyncpa [#allocation4], 0
    %9 = vsyncpa [#allocation7], 0
    %10 = vsyncpa [#allocation5], 0
    // Predicated region
    $region2: #{tpu_custom_call.1} parent=1 // pred_check
      _
    $region3: #{tpu_custom_call.1} parent=1 // pred_check_branch
      %12 = sbr.rel (0) target = $region5
    $region4: #{tpu_custom_call.1} parent=1 // pred_region
      %s14 = ssub.s32 256, 256
      %15 = vsyncadd [#allocation4], %s14
      %s16 = sshll.u32 [#allocation3], 4
      %s17 = int_to_ptr.vmem [resolvable:$true] %s16
      %22 = dma.hbm_to_vmem [thread:$0]  %s0, 256, %s17, [#allocation4], 128, 128, 8
    $region5: #{tpu_custom_call.1} parent=1 // pred_fallthru
      _
    // Predicated region
    $region6: #{tpu_custom_call.1} parent=1 // pred_check
      _
    $region7: #{tpu_custom_call.1} parent=1 // pred_check_branch
      %24 = sbr.rel (0) target = $region9
    $region8: #{tpu_custom_call.1} parent=1 // pred_region
      %s26 = ssub.s32 512, 512
      %27 = vsyncadd [#allocation7], %s26
      %s28 = sshll.u32 [#allocation6], 4
      %s29 = int_to_ptr.vmem [resolvable:$true] %s28
      %34 = dma.hbm_to_vmem [thread:$0]  %s1, 512, %s29, [#allocation7], 128, 128, 8
    $region9: #{tpu_custom_call.1} parent=1 // pred_fallthru
      _
    // Predicated region
    $region10: #{tpu_custom_call.1} parent=1 // pred_check
      _
    $region11: #{tpu_custom_call.1} parent=1 // pred_check_branch
      %36 = sbr.rel (0) target = $region13
    $region12: #{tpu_custom_call.1} parent=1 // pred_region
      _
    $region13: #{tpu_custom_call.1} parent=1 // pred_fallthru
      _
    // Predicated region
    $region14: #{tpu_custom_call.1} parent=1 // pred_check
      _
    $region15: #{tpu_custom_call.1} parent=1 // pred_check_branch
      %38 = sbr.rel (0) target = $region17
    $region16: #{tpu_custom_call.1} parent=1 // pred_region
      %39 = dma.done [#allocation4], 256
    $region17: #{tpu_custom_call.1} parent=1 // pred_fallthru
      _
    // Predicated region
    $region18: #{tpu_custom_call.1} parent=1 // pred_check
      _
    $region19: #{tpu_custom_call.1} parent=1 // pred_check_branch
      %41 = sbr.rel (0) target = $region21
    $region20: #{tpu_custom_call.1} parent=1 // pred_region
      %42 = dma.done [#allocation7], 512
    $region21: #{tpu_custom_call.1} parent=1 // pred_fallthru
      _
    %p43 = scmp.eq.s32.totalorder 0, 0
    // Predicated region
    $region22: #{tpu_custom_call.1} parent=1 // pred_check
      %p44 = pneg %p43
    $region23: #{tpu_custom_call.1} parent=1 // pred_check_branch
      %46 = sbr.rel (%p44) target = $region25
    $region24: #{tpu_custom_call.1} parent=1 // pred_region
      %vm47 = vcmask 261120
      %48 = vst.msk [vmem:[#allocation2] sm:$0xff] %vm47, 0.0
      %49 = vst.msk [vmem:[#allocation2 + $0x8] sm:$0xff] %vm47, 0.0
    $region25: #{tpu_custom_call.1} parent=1 // pred_fallthru
      _
    %v50 = vld [vmem:[#allocation2] sm:$0xff]
    %v51 = vld [vmem:[#allocation2 + $0x8] sm:$0xff]
    %v52 = vld [vmem:[#allocation3] sm:$0xff]
    %v53 = vld [vmem:[#allocation3 + $0x8] sm:$0xff]
    %v54 = vld [vmem:[#allocation6] sm:$0xff]
    %v55 = vld [vmem:[#allocation6 + $0x8] sm:$0xff]
    %v56 = vld [vmem:[#allocation6 + $0x10] sm:$0xff]
    %v57 = vld [vmem:[#allocation6 + $0x18] sm:$0xff]
    %vm58 = vcmask 261120
    %v60 = vsel %vm58, %v52, 0
    %v63 = vsel %vm58, %v53, 0
    %v66 = vsel %vm58, %v54, 0
    %v69 = vsel %vm58, %v55, 0
    %v72 = vsel %vm58, %v56, 0
    %v75 = vsel %vm58, %v57, 0
    %77 = vmatprep.subr.mxu0 0.0
    %78 = vmatpush1.xpose.msra.mxu0 0.0
    %79 = vmatprep.subr.mxu0 0.0
    %80 = vmatpush1.xpose.msra.mxu0 0.0
    %81 = vmatprep.subr.mxu0 0.0
    %82 = vmatpush1.xpose.msra.mxu0 0.0
    %83 = vmatprep.subr.mxu0 0.0
    %84 = vmatpush1.xpose.msra.mxu0 0.0
    %85 = vmatprep.subr.mxu0 0.0
    %86 = vmatpush1.xpose.msra.mxu0 0.0
    %87 = vmatprep.subr.mxu0 0.0
    %88 = vmatpush1.xpose.msra.mxu0 0.0
    %89 = vmatprep.subr.mxu0 0.0
    %90 = vmatpush1.xpose.msra.mxu0 0.0
    %91 = vmatprep.subr.mxu0 0.0
    %92 = vmatpush1.xpose.msra.mxu0 0.0
    %93 = vmatprep.subr.mxu0 0.0
    %94 = vmatpush1.xpose.msra.mxu0 0.0
    %95 = vmatprep.subr.mxu0 0.0
    %96 = vmatpush1.xpose.msra.mxu0 0.0
    %97 = vmatprep.subr.mxu0 0.0
    %98 = vmatpush1.xpose.msra.mxu0 0.0
    %99 = vmatprep.subr.mxu0 0.0
    %100 = vmatpush1.xpose.msra.mxu0 0.0
    %101 = vmatprep.subr.mxu0 0.0
    %102 = vmatpush1.xpose.msra.mxu0 %v75
    %103 = vmatprep.subr.mxu0 0.0
    %104 = vmatpush1.xpose.msra.mxu0 %v72
    %105 = vmatprep.subr.mxu0 0.0
    %106 = vmatpush1.xpose.msra.mxu0 %v69
    %107 = vmatprep.subr.mxu0 0.0
    %108 = vmatpush1.xpose.msra.mxu0 %v66
    %109 = vmatprep.subr.mxu0 0.0
    %110 = vmatpush2.xpose.msra.mxu0 0.0
    %111 = vmatprep.subr.mxu0 0.0
    %112 = vmatpush2.xpose.msra.mxu0 0.0
    %113 = vmatprep.subr.mxu0 0.0
    %114 = vmatpush2.xpose.msra.mxu0 0.0
    %115 = vmatprep.subr.mxu0 0.0
    %116 = vmatpush2.xpose.msra.mxu0 0.0
    %117 = vmatprep.subr.mxu0 0.0
    %118 = vmatpush2.xpose.msra.mxu0 0.0
    %119 = vmatprep.subr.mxu0 0.0
    %120 = vmatpush2.xpose.msra.mxu0 0.0
    %121 = vmatprep.subr.mxu0 0.0
    %122 = vmatpush2.xpose.msra.mxu0 0.0
    %123 = vmatprep.subr.mxu0 0.0
    %124 = vmatpush2.xpose.msra.mxu0 0.0
    %125 = vmatprep.subr.mxu0 0.0
    %126 = vmatpush2.xpose.msra.mxu0 0.0
    %127 = vmatprep.subr.mxu0 0.0
    %128 = vmatpush2.xpose.msra.mxu0 0.0
    %129 = vmatprep.subr.mxu0 0.0
    %130 = vmatpush2.xpose.msra.mxu0 0.0
    %131 = vmatprep.subr.mxu0 0.0
    %132 = vmatpush2.xpose.msra.mxu0 0.0
    %133 = vmatprep.subr.mxu0 0.0
    %134 = vmatpush2.xpose.msra.mxu0 0.0
    %135 = vmatprep.subr.mxu0 0.0
    %136 = vmatpush2.xpose.msra.mxu0 0.0
    %137 = vmatprep.subr.mxu0 0.0
    %138 = vmatpush2.xpose.msra.mxu0 0.0
    %139 = vmatprep.subr.mxu0 0.0
    %140 = vmatpush2.xpose.msra.mxu0 0.0
    %141 = vmatprep.mubr.f32.mxu0 0.0
    %142 = vmatmul.mubr.f32.gmra.mxu0 %v60
    %v143 = vpop.f32.mrf.mxu0
    %v144 = vadd.f32 0.0, %v143
    %v145 = vpop.f32.mrf.mxu0
    %146 = vmatprep.mubr.f32.mxu0 0.0
    %147 = vmatmul.mubr.f32.gmra.mxu0 %v63
    %v148 = vpop.f32.mrf.mxu0
    %v149 = vadd.f32 0.0, %v148
    %v150 = vpop.f32.mrf.mxu0
    %151 = vdwg.mxu0
    %v152 = vadd.f32 %v50, %v144
    %v153 = vadd.f32 %v51, %v149
    %154 = vst.msk [vmem:[#allocation2] sm:$0xff] %vm58, %v152
    %155 = vst.msk [vmem:[#allocation2 + $0x8] sm:$0xff] %vm58, %v153
    // Predicated region
    $region26: #{tpu_custom_call.1} parent=1 // pred_check
      %p156 = pneg %p43
    $region27: #{tpu_custom_call.1} parent=1 // pred_check_branch
      %158 = sbr.rel (%p156) target = $region29
    $region28: #{tpu_custom_call.1} parent=1 // pred_region
      %v159 = vld [vmem:[#allocation2] sm:$0xff]
      %v160 = vld [vmem:[#allocation2 + $0x8] sm:$0xff]
      %v161 = vmul.f32 %v159, 0.17677669
      %v162 = vmul.f32 %v160, 0.17677669
      %v163 = vld [vmem:[%s2] sm:$0x1]
      %v165 = vlaneseq
      %v166 = vshrl.u32 %v165, 7
      %v167 = vsub.s32 0, %v166
      %v168 = vrot.slane %v163, %v167
      %v170 = vadd.f32 %v161, %v168
      %v171 = vadd.f32 %v162, %v168
      %172 = vst.msk [vmem:[#allocation8] sm:$0xff] %vm58, %v170
      %173 = vst.msk [vmem:[#allocation8 + $0x8] sm:$0xff] %vm58, %v171
    $region29: #{tpu_custom_call.1} parent=1 // pred_fallthru
      _
    // Predicated region
    $region30: #{tpu_custom_call.1} parent=1 // pred_check
      _
    $region31: #{tpu_custom_call.1} parent=1 // pred_check_branch
      %175 = sbr.rel (0) target = $region33
    $region32: #{tpu_custom_call.1} parent=1 // pred_region
      %s177 = ssub.s32 256, 256
      %178 = vsyncadd [#allocation5], %s177
      %s179 = sshll.u32 [#allocation8], 4
      %s180 = int_to_ptr.vmem [resolvable:$true] %s179
      %185 = dma.vmem_to_hbm [thread:$0]  %s180, 256, %s3, [#allocation5], 128, 128, 8
    $region33: #{tpu_custom_call.1} parent=1 // pred_fallthru
      _
    // Predicated region
    $region34: #{tpu_custom_call.1} parent=1 // pred_check
      _
    $region35: #{tpu_custom_call.1} parent=1 // pred_check_branch
      %187 = sbr.rel (0) target = $region37
    $region36: #{tpu_custom_call.1} parent=1 // pred_region
      %188 = dma.done [#allocation5], 256
    $region37: #{tpu_custom_call.1} parent=1 // pred_fallthru
      _
    %189 = vsyncpa [#allocation4], 1
    %190 = vsyncpa [#allocation7], 1
    %191 = vsyncpa [#allocation5], 1

</llo_original>
